<compile_context>
chip_gen: v5e
topology: v5e:2x2
jax: 0.10.0
libtpu: 0.0.40
codegen_flags: <defaults>
</compile_context>

<pallas_src>
import functools

import jax
import jax.numpy as jnp
from jax.experimental import pallas as pl
from jax.experimental.pallas import tpu as pltpu

INPUT_DIMS = 2
SAMPLE_NUMS = 10
H1, H2, H3, OUT = 16, 512, 16, 2
H2_CHUNK = 256                      # matches the 256-wide MXU tile on v6e/v7x
assert H2 % H2_CHUNK == 0


def mlp_kernel(x_ref, w1_ref, b1_ref, w2_ref, b2_ref, w3_ref, b3_ref,
               w4t_ref, b4_ref, o_ref):
    """One row-tile of the 4-layer MLP; weights stay VMEM-resident."""
    x = x_ref[...]                                        # (TM, 2) f32

    # Layer 1 (2 -> 16): K=2 wastes the MXU; two VPU broadcast-FMAs instead.
    h1 = (x[:, 0:1] * w1_ref[0:1, :]
          + x[:, 1:2] * w1_ref[1:2, :]
          + b1_ref[...])
    h1 = jnp.maximum(h1, 0.0)
    h1b = h1.astype(jnp.bfloat16)                         # (TM, 16) bf16, once

    # Layers 2+3 (16 -> 512 -> 16), fused over hidden-dim chunks.
    # Each chunk: MXU matmul -> VPU bias+ReLU -> bf16 cast -> MXU partial
    # accumulate into a (TM, 16) f32 accumulator. The full (TM, 512) f32
    # activation (and its bf16 copy) never exists; the cast is consumed
    # in-register right next to the layer-3 dot (key for v5e's 1 vst slot).
    # Statically unrolled (H2 // H2_CHUNK == 2) so ref slices are static.
    acc = None
    for c in range(H2 // H2_CHUNK):
        lo = c * H2_CHUNK
        h2c = jnp.dot(h1b, w2_ref[:, lo:lo + H2_CHUNK],
                      preferred_element_type=jnp.float32)         # (TM, C) f32
        h2c = jnp.maximum(h2c + b2_ref[:, lo:lo + H2_CHUNK], 0.0)
        part = jnp.dot(h2c.astype(jnp.bfloat16), w3_ref[lo:lo + H2_CHUNK, :],
                       preferred_element_type=jnp.float32)        # (TM, 16) f32
        acc = part if acc is None else acc + part

    h3 = jnp.maximum(acc + b3_ref[...], 0.0)               # (TM, 16) f32

    # Layer 4 (16 -> 2): N=2 wastes the MXU; VPU multiply + lane reduction,
    # then write the two output columns directly (no cross-lane concat).
    o0 = jnp.sum(h3 * w4t_ref[0:1, :], axis=-1, keepdims=True) + b4_ref[:, 0:1]
    o1 = jnp.sum(h3 * w4t_ref[1:2, :], axis=-1, keepdims=True) + b4_ref[:, 1:2]
    o_ref[:, 0:1] = jnp.maximum(o0, 0.0).astype(o_ref.dtype)
    o_ref[:, 1:2] = jnp.maximum(o1, 0.0).astype(o_ref.dtype)


def init_params(key):
    """Deterministic synthetic parameters (shapes from Basic_Model.__init__)."""
    ks = jax.random.split(key, 8)

    def lin(kw, kb, fan_in, fan_out):
        # PyTorch Linear default: U(-1/sqrt(fan_in), 1/sqrt(fan_in))
        bound = 1.0 / jnp.sqrt(fan_in)
        w = jax.random.uniform(kw, (fan_in, fan_out), jnp.float32, -bound, bound)
        b = jax.random.uniform(kb, (1, fan_out), jnp.float32, -bound, bound)
        return w, b

    w1, b1 = lin(ks[0], ks[1], INPUT_DIMS, H1)
    w2, b2 = lin(ks[2], ks[3], H1, H2)
    w3, b3 = lin(ks[4], ks[5], H2, H3)
    w4, b4 = lin(ks[6], ks[7], H3, OUT)
    return (w1, b1, w2, b2, w3, b3, w4, b4)


def prepare_kernel_params(params):
    """bf16-cast the MXU layers' weights; pre-transpose w4 for the VPU path."""
    (w1, b1, w2, b2, w3, b3, w4, b4) = params
    return (w1, b1,
            w2.astype(jnp.bfloat16), b2,
            w3.astype(jnp.bfloat16), b3,
            jnp.transpose(w4), b4)                        # w4t: (2, 16)


def _round_up(v, m):
    return ((v + m - 1) // m) * m


@functools.partial(jax.jit, static_argnames=("block_rows",))
def basic_model_forward(x, kparams, *, block_rows=1024):
    """x: (B, S, input_dims) float32 -> (B, S, 2) float32."""
    B, S, D = x.shape
    assert D == INPUT_DIMS
    n = B * S

    # Row tile: large enough to amortize the ~0.35 us per-step overhead, but
    # always split into >= 2 blocks so the "parallel" axis can shard across
    # both v7x TensorCores (harmless on single-TC v5e/v6e). tm is a multiple
    # of 8; the ragged last block is handled by Pallas partial-block DMA
    # (rows are independent, padding rows are never written back).
    tm = min(block_rows, max(8, _round_up(pl.cdiv(n, 2), 8)))
    nb = pl.cdiv(n, tm)

    x2 = x.reshape(n, D)                                  # free reshape, no pad copy
    (w1, b1, w2, b2, w3, b3, w4t, b4) = kparams

    # Weights/biases: constant index_map -> fetched once, VMEM-resident.
    resident = lambda a: pl.BlockSpec(a.shape, lambda i: (0,) * a.ndim)

    flops = 2 * n * (INPUT_DIMS * H1 + H1 * H2 + H2 * H3 + H3 * OUT)
    bytes_accessed = (x2.size * x2.dtype.itemsize + n * OUT * 4
                      + sum(a.size * a.dtype.itemsize for a in kparams))

    # VMEM budget @ tm=1024 (worst case, lane-padded):
    #   x/out (tm,2)->(tm,128) double buffers ~2 MiB, resident weights
    #   ~0.4 MiB, fused chunk intermediates (tm,256) f32+bf16 + (tm,16)
    #   accumulators ~6-8 MiB  => well under the explicit 32 MiB limit,
    #   which also fits v7x's smaller 64 MiB physical VMEM.
    out = pl.pallas_call(
        mlp_kernel,
        out_shape=jax.ShapeDtypeStruct((n, OUT), jnp.float32),
        grid=(nb,),
        in_specs=[pl.BlockSpec((tm, INPUT_DIMS), lambda i: (i, 0)),
                  resident(w1), resident(b1),
                  resident(w2), resident(b2),
                  resident(w3), resident(b3),
                  resident(w4t), resident(b4)],
        out_specs=pl.BlockSpec((tm, OUT), lambda i: (i, 0)),
        compiler_params=pltpu.CompilerParams(
            dimension_semantics=("parallel",),
            vmem_limit_bytes=32 * 1024 * 1024),
        cost_estimate=pl.CostEstimate(flops=int(flops), transcendentals=0,
                                      bytes_accessed=int(bytes_accessed)),
    )(x2, w1, b1, w2, b2, w3, b3, w4t, b4)

    return out.reshape(B, S, OUT)


def reference_forward(x, params):
    """Pure-JAX reference with the same bf16 operand casts on layers 2/3."""
    (w1, b1, w2, b2, w3, b3, w4, b4) = params
    hp = jax.lax.Precision.HIGHEST
    B, S, D = x.shape
    h = x.reshape(B * S, D)
    h = jax.nn.relu(jnp.dot(h, w1, precision=hp) + b1)
    h = jax.nn.relu(jnp.dot(h.astype(jnp.bfloat16), w2.astype(jnp.bfloat16),
                            preferred_element_type=jnp.float32) + b2)
    h = jax.nn.relu(jnp.dot(h.astype(jnp.bfloat16), w3.astype(jnp.bfloat16),
                            preferred_element_type=jnp.float32) + b3)
    h = jax.nn.relu(jnp.dot(h, w4, precision=hp) + b4)
    return h.reshape(B, S, OUT)


if __name__ == "__main__":
    key = jax.random.PRNGKey(0)
    k_x, k_x2, k_x3, k_p = jax.random.split(key, 4)

    params = init_params(k_p)
    kparams = prepare_kernel_params(params)

    # Small shape matching the module defaults: (batch, sample_nums, input_dims).
    x_small = jax.random.normal(k_x, (2, SAMPLE_NUMS, INPUT_DIMS), jnp.float32)
    out_small = jax.block_until_ready(basic_model_forward(x_small, kparams))
    ref_small = reference_forward(x_small, params)
    assert out_small.shape == (2, SAMPLE_NUMS, OUT)
    assert jnp.allclose(out_small, ref_small, atol=1e-3, rtol=1e-3), (
        float(jnp.max(jnp.abs(out_small - ref_small))))

    # Medium batch: two balanced grid steps (v7x TC split), ragged last block.
    x_med = jax.random.normal(k_x2, (300, SAMPLE_NUMS, INPUT_DIMS), jnp.float32)
    out_med = jax.block_until_ready(basic_model_forward(x_med, kparams))
    ref_med = reference_forward(x_med, params)
    assert jnp.allclose(out_med, ref_med, atol=1e-3, rtol=1e-3), (
        float(jnp.max(jnp.abs(out_med - ref_med))))

    # Larger batch: many 1024-row grid steps + a ragged final block.
    x_big = jax.random.normal(k_x3, (1231, SAMPLE_NUMS, INPUT_DIMS), jnp.float32)
    out_big = jax.block_until_ready(basic_model_forward(x_big, kparams))
    ref_big = reference_forward(x_big, params)
    assert jnp.allclose(out_big, ref_big, atol=1e-3, rtol=1e-3), (
        float(jnp.max(jnp.abs(out_big - ref_big))))

    # TODO(synk): get_permutation_matrix / cal_distance / cal_distance_loss are
    # training-time Chamfer-loss helpers, not part of forward(); not implemented.
    print("KERNEL_OK")
</pallas_src>

<mosaic_0001>
module attributes {stable_mosaic.version = 11 : i64} {
  func.func @mlp_kernel(%arg0: i32, %arg1: memref<16x2xf32, #tpu.memory_space<vmem>>, %arg2: memref<2x16xf32, #tpu.memory_space<vmem>>, %arg3: memref<1x16xf32, #tpu.memory_space<vmem>>, %arg4: memref<16x512xbf16, #tpu.memory_space<vmem>>, %arg5: memref<1x512xf32, #tpu.memory_space<vmem>>, %arg6: memref<512x16xbf16, #tpu.memory_space<vmem>>, %arg7: memref<1x16xf32, #tpu.memory_space<vmem>>, %arg8: memref<2x16xf32, #tpu.memory_space<vmem>>, %arg9: memref<1x2xf32, #tpu.memory_space<vmem>>, %arg10: memref<16x2xf32, #tpu.memory_space<vmem>>) attributes {dimension_semantics = [#tpu.dimension_semantics<parallel>], iteration_bounds = array<i64: 2>, scalar_prefetch = 0 : i64, scratch_operands = 0 : i64, tpu.core_type = #tpu.core_type<tc>, window_params = [{transform_indices = @transform_0, window_bounds = array<i64: 16, 2>}, {pipeline_mode = #tpu.pipeline_mode<synchronous>, transform_indices = @transform_1, window_bounds = array<i64: 2, 16>}, {pipeline_mode = #tpu.pipeline_mode<synchronous>, transform_indices = @transform_2, window_bounds = array<i64: 1, 16>}, {pipeline_mode = #tpu.pipeline_mode<synchronous>, transform_indices = @transform_3, window_bounds = array<i64: 16, 512>}, {pipeline_mode = #tpu.pipeline_mode<synchronous>, transform_indices = @transform_4, window_bounds = array<i64: 1, 512>}, {pipeline_mode = #tpu.pipeline_mode<synchronous>, transform_indices = @transform_5, window_bounds = array<i64: 512, 16>}, {pipeline_mode = #tpu.pipeline_mode<synchronous>, transform_indices = @transform_6, window_bounds = array<i64: 1, 16>}, {pipeline_mode = #tpu.pipeline_mode<synchronous>, transform_indices = @transform_7, window_bounds = array<i64: 2, 16>}, {pipeline_mode = #tpu.pipeline_mode<synchronous>, transform_indices = @transform_8, window_bounds = array<i64: 1, 2>}, {transform_indices = @transform_9, window_bounds = array<i64: 16, 2>}]} {
    %c0 = arith.constant 0 : index
    %c0_0 = arith.constant 0 : index
    %0 = vector.load %arg1[%c0, %c0_0] : memref<16x2xf32, #tpu.memory_space<vmem>>, vector<16x2xf32>
    %1 = vector.extract_strided_slice %0 {offsets = [0, 0], sizes = [16, 1], strides = [1, 1]} : vector<16x2xf32> to vector<16x1xf32>
    %c0_1 = arith.constant 0 : index
    %c0_2 = arith.constant 0 : index
    %2 = vector.load %arg2[%c0_1, %c0_2] : memref<2x16xf32, #tpu.memory_space<vmem>>, vector<1x16xf32>
    %3 = vector.broadcast %1 : vector<16x1xf32> to vector<16x16xf32>
    %4 = vector.broadcast %2 : vector<1x16xf32> to vector<16x16xf32>
    %5 = arith.mulf %3, %4 : vector<16x16xf32>
    %6 = vector.extract_strided_slice %0 {offsets = [0, 1], sizes = [16, 1], strides = [1, 1]} : vector<16x2xf32> to vector<16x1xf32>
    %c1 = arith.constant 1 : index
    %c0_3 = arith.constant 0 : index
    %7 = vector.load %arg2[%c1, %c0_3] : memref<2x16xf32, #tpu.memory_space<vmem>>, vector<1x16xf32>
    %8 = vector.broadcast %6 : vector<16x1xf32> to vector<16x16xf32>
    %9 = vector.broadcast %7 : vector<1x16xf32> to vector<16x16xf32>
    %10 = arith.mulf %8, %9 : vector<16x16xf32>
    %11 = arith.addf %5, %10 : vector<16x16xf32>
    %c0_4 = arith.constant 0 : index
    %c0_5 = arith.constant 0 : index
    %12 = vector.load %arg3[%c0_4, %c0_5] : memref<1x16xf32, #tpu.memory_space<vmem>>, vector<1x16xf32>
    %13 = vector.broadcast %12 : vector<1x16xf32> to vector<16x16xf32>
    %14 = arith.addf %11, %13 : vector<16x16xf32>
    %cst = arith.constant 0.000000e+00 : f32
    %15 = vector.broadcast %cst : f32 to vector<16x16xf32>
    %16 = arith.maximumf %14, %15 : vector<16x16xf32>
    %17 = arith.truncf %16 : vector<16x16xf32> to vector<16x16xbf16>
    %c0_6 = arith.constant 0 : index
    %c0_7 = arith.constant 0 : index
    %18 = vector.load %arg4[%c0_6, %c0_7] : memref<16x512xbf16, #tpu.memory_space<vmem>>, vector<16x256xbf16>
    %cst_8 = arith.constant dense<0.000000e+00> : vector<16x256xf32>
    %19 = tpu.matmul %17, %18, %cst_8 {dimension_numbers = #tpu.dot_dimension_numbers<[1], [0], [0], [1], [0, 0, 1, 1], [], []>} : vector<16x16xbf16>, vector<16x256xbf16>, vector<16x256xf32> -> vector<16x256xf32>
    %c0_9 = arith.constant 0 : index
    %c0_10 = arith.constant 0 : index
    %20 = vector.load %arg5[%c0_9, %c0_10] : memref<1x512xf32, #tpu.memory_space<vmem>>, vector<1x256xf32>
    %21 = vector.broadcast %20 : vector<1x256xf32> to vector<16x256xf32>
    %22 = arith.addf %19, %21 : vector<16x256xf32>
    %cst_11 = arith.constant 0.000000e+00 : f32
    %23 = vector.broadcast %cst_11 : f32 to vector<16x256xf32>
    %24 = arith.maximumf %22, %23 : vector<16x256xf32>
    %25 = arith.truncf %24 : vector<16x256xf32> to vector<16x256xbf16>
    %c0_12 = arith.constant 0 : index
    %c0_13 = arith.constant 0 : index
    %26 = vector.load %arg6[%c0_12, %c0_13] : memref<512x16xbf16, #tpu.memory_space<vmem>>, vector<256x16xbf16>
    %cst_14 = arith.constant dense<0.000000e+00> : vector<16x16xf32>
    %27 = tpu.matmul %25, %26, %cst_14 {dimension_numbers = #tpu.dot_dimension_numbers<[1], [0], [0], [1], [0, 0, 1, 1], [], []>} : vector<16x256xbf16>, vector<256x16xbf16>, vector<16x16xf32> -> vector<16x16xf32>
    %c0_15 = arith.constant 0 : index
    %c256 = arith.constant 256 : index
    %28 = vector.load %arg4[%c0_15, %c256] : memref<16x512xbf16, #tpu.memory_space<vmem>>, vector<16x256xbf16>
    %cst_16 = arith.constant dense<0.000000e+00> : vector<16x256xf32>
    %29 = tpu.matmul %17, %28, %cst_16 {dimension_numbers = #tpu.dot_dimension_numbers<[1], [0], [0], [1], [0, 0, 1, 1], [], []>} : vector<16x16xbf16>, vector<16x256xbf16>, vector<16x256xf32> -> vector<16x256xf32>
    %c0_17 = arith.constant 0 : index
    %c256_18 = arith.constant 256 : index
    %30 = vector.load %arg5[%c0_17, %c256_18] : memref<1x512xf32, #tpu.memory_space<vmem>>, vector<1x256xf32>
    %31 = vector.broadcast %30 : vector<1x256xf32> to vector<16x256xf32>
    %32 = arith.addf %29, %31 : vector<16x256xf32>
    %cst_19 = arith.constant 0.000000e+00 : f32
    %33 = vector.broadcast %cst_19 : f32 to vector<16x256xf32>
    %34 = arith.maximumf %32, %33 : vector<16x256xf32>
    %35 = arith.truncf %34 : vector<16x256xf32> to vector<16x256xbf16>
    %c256_20 = arith.constant 256 : index
    %c0_21 = arith.constant 0 : index
    %36 = vector.load %arg6[%c256_20, %c0_21] : memref<512x16xbf16, #tpu.memory_space<vmem>>, vector<256x16xbf16>
    %cst_22 = arith.constant dense<0.000000e+00> : vector<16x16xf32>
    %37 = tpu.matmul %35, %36, %cst_22 {dimension_numbers = #tpu.dot_dimension_numbers<[1], [0], [0], [1], [0, 0, 1, 1], [], []>} : vector<16x256xbf16>, vector<256x16xbf16>, vector<16x16xf32> -> vector<16x16xf32>
    %38 = arith.addf %27, %37 : vector<16x16xf32>
    %c0_23 = arith.constant 0 : index
    %c0_24 = arith.constant 0 : index
    %39 = vector.load %arg7[%c0_23, %c0_24] : memref<1x16xf32, #tpu.memory_space<vmem>>, vector<1x16xf32>
    %40 = vector.broadcast %39 : vector<1x16xf32> to vector<16x16xf32>
    %41 = arith.addf %38, %40 : vector<16x16xf32>
    %cst_25 = arith.constant 0.000000e+00 : f32
    %42 = vector.broadcast %cst_25 : f32 to vector<16x16xf32>
    %43 = arith.maximumf %41, %42 : vector<16x16xf32>
    %c0_26 = arith.constant 0 : index
    %c0_27 = arith.constant 0 : index
    %44 = vector.load %arg8[%c0_26, %c0_27] : memref<2x16xf32, #tpu.memory_space<vmem>>, vector<1x16xf32>
    %45 = vector.broadcast %44 : vector<1x16xf32> to vector<16x16xf32>
    %46 = arith.mulf %43, %45 : vector<16x16xf32>
    %cst_28 = arith.constant dense<0.000000e+00> : vector<16xf32>
    %47 = vector.multi_reduction <add>, %46, %cst_28 [1] : vector<16x16xf32> to vector<16xf32>
    %48 = vector.shape_cast %47 : vector<16xf32> to vector<16x1xf32>
    %c0_29 = arith.constant 0 : index
    %c0_30 = arith.constant 0 : index
    %49 = vector.load %arg9[%c0_29, %c0_30] : memref<1x2xf32, #tpu.memory_space<vmem>>, vector<1x1xf32>
    %50 = vector.broadcast %49 : vector<1x1xf32> to vector<16x1xf32>
    %51 = arith.addf %48, %50 : vector<16x1xf32>
    %c1_31 = arith.constant 1 : index
    %c0_32 = arith.constant 0 : index
    %52 = vector.load %arg8[%c1_31, %c0_32] : memref<2x16xf32, #tpu.memory_space<vmem>>, vector<1x16xf32>
    %53 = vector.broadcast %52 : vector<1x16xf32> to vector<16x16xf32>
    %54 = arith.mulf %43, %53 : vector<16x16xf32>
    %cst_33 = arith.constant dense<0.000000e+00> : vector<16xf32>
    %55 = vector.multi_reduction <add>, %54, %cst_33 [1] : vector<16x16xf32> to vector<16xf32>
    %56 = vector.shape_cast %55 : vector<16xf32> to vector<16x1xf32>
    %c0_34 = arith.constant 0 : index
    %c1_35 = arith.constant 1 : index
    %57 = vector.load %arg9[%c0_34, %c1_35] : memref<1x2xf32, #tpu.memory_space<vmem>>, vector<1x1xf32>
    %58 = vector.broadcast %57 : vector<1x1xf32> to vector<16x1xf32>
    %59 = arith.addf %56, %58 : vector<16x1xf32>
    %cst_36 = arith.constant 0.000000e+00 : f32
    %60 = vector.broadcast %cst_36 : f32 to vector<16x1xf32>
    %61 = arith.maximumf %51, %60 : vector<16x1xf32>
    %c0_37 = arith.constant 0 : index
    %c0_38 = arith.constant 0 : index
    %62 = vector.load %arg10[%c0_37, %c0_38] : memref<16x2xf32, #tpu.memory_space<vmem>>, vector<16x1xf32>
    tpu.vector_store %arg10[%c0_37, %c0_38], %61 {strides = array<i32>} : memref<16x2xf32, #tpu.memory_space<vmem>>, vector<16x1xf32>,
    %cst_39 = arith.constant 0.000000e+00 : f32
    %63 = vector.broadcast %cst_39 : f32 to vector<16x1xf32>
    %64 = arith.maximumf %59, %63 : vector<16x1xf32>
    %c0_40 = arith.constant 0 : index
    %c1_41 = arith.constant 1 : index
    %65 = vector.load %arg10[%c0_40, %c1_41] : memref<16x2xf32, #tpu.memory_space<vmem>>, vector<16x1xf32>
    tpu.vector_store %arg10[%c0_40, %c1_41], %64 {strides = array<i32>} : memref<16x2xf32, #tpu.memory_space<vmem>>, vector<16x1xf32>,
    return
  }
  func.func @transform_0(%arg0: i32) -> (i32, i32) {
    %c0_i32 = arith.constant 0 : i32
    %c0_i32_0 = arith.constant 0 : i32
    return %arg0, %c0_i32 : i32, i32
  }
  func.func @transform_1(%arg0: i32) -> (i32, i32) {
    %c0_i32 = arith.constant 0 : i32
    %c0_i32_0 = arith.constant 0 : i32
    %c0_i32_1 = arith.constant 0 : i32
    return %c0_i32, %c0_i32_0 : i32, i32
  }
  func.func @transform_2(%arg0: i32) -> (i32, i32) {
    %c0_i32 = arith.constant 0 : i32
    %c0_i32_0 = arith.constant 0 : i32
    %c0_i32_1 = arith.constant 0 : i32
    return %c0_i32, %c0_i32_0 : i32, i32
  }
  func.func @transform_3(%arg0: i32) -> (i32, i32) {
    %c0_i32 = arith.constant 0 : i32
    %c0_i32_0 = arith.constant 0 : i32
    %c0_i32_1 = arith.constant 0 : i32
    return %c0_i32, %c0_i32_0 : i32, i32
  }
  func.func @transform_4(%arg0: i32) -> (i32, i32) {
    %c0_i32 = arith.constant 0 : i32
    %c0_i32_0 = arith.constant 0 : i32
    %c0_i32_1 = arith.constant 0 : i32
    return %c0_i32, %c0_i32_0 : i32, i32
  }
  func.func @transform_5(%arg0: i32) -> (i32, i32) {
    %c0_i32 = arith.constant 0 : i32
    %c0_i32_0 = arith.constant 0 : i32
    %c0_i32_1 = arith.constant 0 : i32
    return %c0_i32, %c0_i32_0 : i32, i32
  }
  func.func @transform_6(%arg0: i32) -> (i32, i32) {
    %c0_i32 = arith.constant 0 : i32
    %c0_i32_0 = arith.constant 0 : i32
    %c0_i32_1 = arith.constant 0 : i32
    return %c0_i32, %c0_i32_0 : i32, i32
  }
  func.func @transform_7(%arg0: i32) -> (i32, i32) {
    %c0_i32 = arith.constant 0 : i32
    %c0_i32_0 = arith.constant 0 : i32
    %c0_i32_1 = arith.constant 0 : i32
    return %c0_i32, %c0_i32_0 : i32, i32
  }
  func.func @transform_8(%arg0: i32) -> (i32, i32) {
    %c0_i32 = arith.constant 0 : i32
    %c0_i32_0 = arith.constant 0 : i32
    %c0_i32_1 = arith.constant 0 : i32
    return %c0_i32, %c0_i32_0 : i32, i32
  }
  func.func @transform_9(%arg0: i32) -> (i32, i32) {
    %c0_i32 = arith.constant 0 : i32
    %c0_i32_0 = arith.constant 0 : i32
    return %arg0, %c0_i32 : i32, i32
  }
}

</mosaic_0001>

<llo_original>
// kernel: basic_model_forward.1
$region0: #{basic_model_forward.1}
  #allocation0 [shape = 'u32[]', space=smem, size = 0x4, offset = 0x4, fixed_abs, tag = 'smem constant byte address 0x4 - core index']
  #allocation1 [shape = 'u32[72,128]{1,0:T(1,128)}', space=vmem, size = 0x9000, scoped, tag = 'internal scratch']
  %s0 = inlined_call_operand.vmem [shape: f32[20,2], index: 0, kind: input, shape index: {}]
  %s1 = inlined_call_operand.vmem [shape: f32[2,16], index: 1, kind: input, shape index: {}]
  %s2 = inlined_call_operand.vmem [shape: f32[1,16], index: 2, kind: input, shape index: {}]
  %s3 = inlined_call_operand.vmem [shape: bf16[16,512], index: 3, kind: input, shape index: {}]
  %s4 = inlined_call_operand.vmem [shape: f32[1,512], index: 4, kind: input, shape index: {}]
  %s5 = inlined_call_operand.vmem [shape: bf16[512,16], index: 5, kind: input, shape index: {}]
  %s6 = inlined_call_operand.vmem [shape: f32[1,16], index: 6, kind: input, shape index: {}]
  %s7 = inlined_call_operand.vmem [shape: f32[2,16], index: 7, kind: input, shape index: {}]
  %s8 = inlined_call_operand.vmem [shape: f32[1,2], index: 8, kind: input, shape index: {}]
  %s9 = inlined_call_operand.vmem [shape: f32[20,2], index: 9, kind: output, shape index: {}]
  %s10 = sld [smem:[#allocation0]]
  $region117: #{basic_model_forward.1} parent=0
    _
  %s12 = ssub.s32 1, %s10
  %s13 = scalar_select 0, %s12, %s10
  $region1: #{basic_model_forward.1} parent=0
    #allocation2 [shape = 'u8[16384]{0}', space=vmem, size = 0x4000, scoped, tag = 'output window, operand 0']
    loop: start=0, step=1, limit=4
    $region2: #{basic_model_forward.1} parent=1 // loop_pre_header
      _
    $region3: #{basic_model_forward.1} parent=1 // loop_header
      %s15 = sphi 0, %s19
      %p16 = scmp.ge.s32.totalorder %s15, 4
      %s25 = sphi 0, %s27
      %s28 = sphi 0, %s25
      %s29 = sphi 0, %s28
      %s45 = sphi 0, %s29
      %s49 = sphi 0, %s49
      %s51 = sphi 0, %s49
      %s52 = sphi 0, %s51
      %s66 = sphi 0, %s52
      %s70 = sphi 0, %s70
      %s72 = sphi 0, %s70
      %s73 = sphi 0, %s72
      %s87 = sphi 0, %s73
      %s91 = sphi 0, %s91
      %s93 = sphi 0, %s91
      %s94 = sphi 0, %s93
      %s108 = sphi 0, %s94
      %s112 = sphi 0, %s112
      %s114 = sphi 0, %s112
      %s115 = sphi 0, %s114
      %s129 = sphi 0, %s115
      %s133 = sphi 0, %s133
      %s135 = sphi 0, %s133
      %s136 = sphi 0, %s135
      %s150 = sphi 0, %s136
      %s154 = sphi 0, %s154
      %s156 = sphi 0, %s154
      %s157 = sphi 0, %s156
      %s171 = sphi 0, %s157
      %s175 = sphi 0, %s175
      %s177 = sphi 0, %s175
      %s178 = sphi 0, %s177
      %s192 = sphi 0, %s178
      %s196 = sphi 0, %s196
      %s198 = sphi 0, %s196
      %s199 = sphi 0, %s198
      %s213 = sphi 0, %s199
      %s219 = sphi 0, %s221
      %s222 = sphi 0, %s219
      %s223 = sphi 0, %s222
      %s239 = sphi 0, %s223
    $region4: #{basic_model_forward.1} parent=1 // loop_header_branch
      %18 = sbr.rel (%p16) target = $region8
    $region5: #{basic_model_forward.1} parent=1 // loop_body
      %s20 = ssub.s32 %s15, 1
      %s21 = ssub.s32 %s15, 2
      %s22 = sadd.s32 %s15, 1
      %s23 = ssub.s32 %s15, %s22
      %p24 = scmp.eq.s32.totalorder %s23, 0
      %s26 = sadd.s32 %s25, 1
      %s27 = scalar_select %p24, %s25, %s26
      %p30 = pneg %p24
      %p31 = scmp.eq.s32.totalorder %s15, 1
      %p32 = por %p30, %p31
      %p33 = scmp.ne.s32.totalorder %s25, %s28
      %p34 = scmp.eq.s32.totalorder %s15, 0
      %p35 = por %p33, %p34
      %p36 = scmp.ne.s32.totalorder %s25, %s28
      %p37 = scmp.eq.s32.totalorder %s20, 1
      %p38 = por %p36, %p37
      %p39 = scmp.ne.s32.totalorder %s28, %s29
      %p40 = scmp.eq.s32.totalorder %s20, 0
      %p41 = por %p39, %p40
      %p42 = scmp.ne.s32.totalorder %s28, %s29
      %p43 = scmp.eq.s32.totalorder %s21, 1
      %p44 = por %p42, %p43
      %p46 = scmp.ne.s32.totalorder %s29, %s45
      %p47 = scmp.eq.s32.totalorder %s21, 0
      %p48 = por %p46, %p47
      %s50 = sadd.s32 %s49, 1
      %p53 = scmp.eq.s32.totalorder %s15, 1
      %p54 = scmp.ne.s32.totalorder %s49, %s51
      %p55 = scmp.eq.s32.totalorder %s15, 0
      %p56 = por %p54, %p55
      %p57 = scmp.ne.s32.totalorder %s49, %s51
      %p58 = scmp.eq.s32.totalorder %s20, 1
      %p59 = por %p57, %p58
      %p60 = scmp.ne.s32.totalorder %s51, %s52
      %p61 = scmp.eq.s32.totalorder %s20, 0
      %p62 = por %p60, %p61
      %p63 = scmp.ne.s32.totalorder %s51, %s52
      %p64 = scmp.eq.s32.totalorder %s21, 1
      %p65 = por %p63, %p64
      %p67 = scmp.ne.s32.totalorder %s52, %s66
      %p68 = scmp.eq.s32.totalorder %s21, 0
      %p69 = por %p67, %p68
      %s71 = sadd.s32 %s70, 1
      %p74 = scmp.eq.s32.totalorder %s15, 1
      %p75 = scmp.ne.s32.totalorder %s70, %s72
      %p76 = scmp.eq.s32.totalorder %s15, 0
      %p77 = por %p75, %p76
      %p78 = scmp.ne.s32.totalorder %s70, %s72
      %p79 = scmp.eq.s32.totalorder %s20, 1
      %p80 = por %p78, %p79
      %p81 = scmp.ne.s32.totalorder %s72, %s73
      %p82 = scmp.eq.s32.totalorder %s20, 0
      %p83 = por %p81, %p82
      %p84 = scmp.ne.s32.totalorder %s72, %s73
      %p85 = scmp.eq.s32.totalorder %s21, 1
      %p86 = por %p84, %p85
      %p88 = scmp.ne.s32.totalorder %s73, %s87
      %p89 = scmp.eq.s32.totalorder %s21, 0
      %p90 = por %p88, %p89
      %s92 = sadd.s32 %s91, 1
      %p95 = scmp.eq.s32.totalorder %s15, 1
      %p96 = scmp.ne.s32.totalorder %s91, %s93
      %p97 = scmp.eq.s32.totalorder %s15, 0
      %p98 = por %p96, %p97
      %p99 = scmp.ne.s32.totalorder %s91, %s93
      %p100 = scmp.eq.s32.totalorder %s20, 1
      %p101 = por %p99, %p100
      %p102 = scmp.ne.s32.totalorder %s93, %s94
      %p103 = scmp.eq.s32.totalorder %s20, 0
      %p104 = por %p102, %p103
      %p105 = scmp.ne.s32.totalorder %s93, %s94
      %p106 = scmp.eq.s32.totalorder %s21, 1
      %p107 = por %p105, %p106
      %p109 = scmp.ne.s32.totalorder %s94, %s108
      %p110 = scmp.eq.s32.totalorder %s21, 0
      %p111 = por %p109, %p110
      %s113 = sadd.s32 %s112, 1
      %p116 = scmp.eq.s32.totalorder %s15, 1
      %p117 = scmp.ne.s32.totalorder %s112, %s114
      %p118 = scmp.eq.s32.totalorder %s15, 0
      %p119 = por %p117, %p118
      %p120 = scmp.ne.s32.totalorder %s112, %s114
      %p121 = scmp.eq.s32.totalorder %s20, 1
      %p122 = por %p120, %p121
      %p123 = scmp.ne.s32.totalorder %s114, %s115
      %p124 = scmp.eq.s32.totalorder %s20, 0
      %p125 = por %p123, %p124
      %p126 = scmp.ne.s32.totalorder %s114, %s115
      %p127 = scmp.eq.s32.totalorder %s21, 1
      %p128 = por %p126, %p127
      %p130 = scmp.ne.s32.totalorder %s115, %s129
      %p131 = scmp.eq.s32.totalorder %s21, 0
      %p132 = por %p130, %p131
      %s134 = sadd.s32 %s133, 1
      %p137 = scmp.eq.s32.totalorder %s15, 1
      %p138 = scmp.ne.s32.totalorder %s133, %s135
      %p139 = scmp.eq.s32.totalorder %s15, 0
      %p140 = por %p138, %p139
      %p141 = scmp.ne.s32.totalorder %s133, %s135
      %p142 = scmp.eq.s32.totalorder %s20, 1
      %p143 = por %p141, %p142
      %p144 = scmp.ne.s32.totalorder %s135, %s136
      %p145 = scmp.eq.s32.totalorder %s20, 0
      %p146 = por %p144, %p145
      %p147 = scmp.ne.s32.totalorder %s135, %s136
      %p148 = scmp.eq.s32.totalorder %s21, 1
      %p149 = por %p147, %p148
      %p151 = scmp.ne.s32.totalorder %s136, %s150
      %p152 = scmp.eq.s32.totalorder %s21, 0
      %p153 = por %p151, %p152
      %s155 = sadd.s32 %s154, 1
      %p158 = scmp.eq.s32.totalorder %s15, 1
      %p159 = scmp.ne.s32.totalorder %s154, %s156
      %p160 = scmp.eq.s32.totalorder %s15, 0
      %p161 = por %p159, %p160
      %p162 = scmp.ne.s32.totalorder %s154, %s156
      %p163 = scmp.eq.s32.totalorder %s20, 1
      %p164 = por %p162, %p163
      %p165 = scmp.ne.s32.totalorder %s156, %s157
      %p166 = scmp.eq.s32.totalorder %s20, 0
      %p167 = por %p165, %p166
      %p168 = scmp.ne.s32.totalorder %s156, %s157
      %p169 = scmp.eq.s32.totalorder %s21, 1
      %p170 = por %p168, %p169
      %p172 = scmp.ne.s32.totalorder %s157, %s171
      %p173 = scmp.eq.s32.totalorder %s21, 0
      %p174 = por %p172, %p173
      %s176 = sadd.s32 %s175, 1
      %p179 = scmp.eq.s32.totalorder %s15, 1
      %p180 = scmp.ne.s32.totalorder %s175, %s177
      %p181 = scmp.eq.s32.totalorder %s15, 0
      %p182 = por %p180, %p181
      %p183 = scmp.ne.s32.totalorder %s175, %s177
      %p184 = scmp.eq.s32.totalorder %s20, 1
      %p185 = por %p183, %p184
      %p186 = scmp.ne.s32.totalorder %s177, %s178
      %p187 = scmp.eq.s32.totalorder %s20, 0
      %p188 = por %p186, %p187
      %p189 = scmp.ne.s32.totalorder %s177, %s178
      %p190 = scmp.eq.s32.totalorder %s21, 1
      %p191 = por %p189, %p190
      %p193 = scmp.ne.s32.totalorder %s178, %s192
      %p194 = scmp.eq.s32.totalorder %s21, 0
      %p195 = por %p193, %p194
      %s197 = sadd.s32 %s196, 1
      %p200 = scmp.eq.s32.totalorder %s15, 1
      %p201 = scmp.ne.s32.totalorder %s196, %s198
      %p202 = scmp.eq.s32.totalorder %s15, 0
      %p203 = por %p201, %p202
      %p204 = scmp.ne.s32.totalorder %s196, %s198
      %p205 = scmp.eq.s32.totalorder %s20, 1
      %p206 = por %p204, %p205
      %p207 = scmp.ne.s32.totalorder %s198, %s199
      %p208 = scmp.eq.s32.totalorder %s20, 0
      %p209 = por %p207, %p208
      %p210 = scmp.ne.s32.totalorder %s198, %s199
      %p211 = scmp.eq.s32.totalorder %s21, 1
      %p212 = por %p210, %p211
      %p214 = scmp.ne.s32.totalorder %s199, %s213
      %p215 = scmp.eq.s32.totalorder %s21, 0
      %p216 = por %p214, %p215
      %s217 = ssub.s32 %s15, %s22
      %p218 = scmp.eq.s32.totalorder %s217, 0
      %s220 = sadd.s32 %s219, 1
      %s221 = scalar_select %p218, %s219, %s220
      %p224 = pneg %p218
      %p225 = scmp.eq.s32.totalorder %s15, 1
      %p226 = por %p224, %p225
      %p227 = scmp.ne.s32.totalorder %s219, %s222
      %p228 = scmp.eq.s32.totalorder %s15, 0
      %p229 = por %p227, %p228
      %p230 = scmp.ne.s32.totalorder %s219, %s222
      %p231 = scmp.eq.s32.totalorder %s20, 1
      %p232 = por %p230, %p231
      %p233 = scmp.ne.s32.totalorder %s222, %s223
      %p234 = scmp.eq.s32.totalorder %s20, 0
      %p235 = por %p233, %p234
      %p236 = scmp.ne.s32.totalorder %s222, %s223
      %p237 = scmp.eq.s32.totalorder %s21, 1
      %p238 = por %p236, %p237
      %p240 = scmp.ne.s32.totalorder %s223, %s239
      %p241 = scmp.eq.s32.totalorder %s21, 0
      %p242 = por %p240, %p241
      %p243 = scmp.le.s32.totalorder 1, %s15
      %p244 = scmp.lt.s32.totalorder %s15, 3
      %p245 = pnand %p243, %p244
      %p246 = pneg %p245
      // Predicated region
      $region9: #{basic_model_forward.1} parent=5 // pred_check
        _
      $region10: #{basic_model_forward.1} parent=5 // pred_check_branch
        %248 = sbr.rel (%p245) target = $region12
      $region11: #{basic_model_forward.1} parent=5 // pred_region
        %s249 = ssub.s32 %s15, 1
        // Predicated region
        $region13: #{basic_model_forward.1} parent=11 // pred_check
          %p250 = pneg %p62
        $region14: #{basic_model_forward.1} parent=11 // pred_check_branch
          %252 = sbr.rel (%p250) target = $region16
        $region15: #{basic_model_forward.1} parent=11 // pred_region
          _
        $region16: #{basic_model_forward.1} parent=11 // pred_fallthru
          _
        // Predicated region
        $region17: #{basic_model_forward.1} parent=11 // pred_check
          %p253 = pneg %p83
        $region18: #{basic_model_forward.1} parent=11 // pred_check_branch
          %255 = sbr.rel (%p253) target = $region20
        $region19: #{basic_model_forward.1} parent=11 // pred_region
          _
        $region20: #{basic_model_forward.1} parent=11 // pred_fallthru
          _
        // Predicated region
        $region21: #{basic_model_forward.1} parent=11 // pred_check
          %p256 = pneg %p104
        $region22: #{basic_model_forward.1} parent=11 // pred_check_branch
          %258 = sbr.rel (%p256) target = $region24
        $region23: #{basic_model_forward.1} parent=11 // pred_region
          _
        $region24: #{basic_model_forward.1} parent=11 // pred_fallthru
          _
        // Predicated region
        $region25: #{basic_model_forward.1} parent=11 // pred_check
          %p259 = pneg %p125
        $region26: #{basic_model_forward.1} parent=11 // pred_check_branch
          %261 = sbr.rel (%p259) target = $region28
        $region27: #{basic_model_forward.1} parent=11 // pred_region
          _
        $region28: #{basic_model_forward.1} parent=11 // pred_fallthru
          _
        // Predicated region
        $region29: #{basic_model_forward.1} parent=11 // pred_check
          %p262 = pneg %p146
        $region30: #{basic_model_forward.1} parent=11 // pred_check_branch
          %264 = sbr.rel (%p262) target = $region32
        $region31: #{basic_model_forward.1} parent=11 // pred_region
          _
        $region32: #{basic_model_forward.1} parent=11 // pred_fallthru
          _
        // Predicated region
        $region33: #{basic_model_forward.1} parent=11 // pred_check
          %p265 = pneg %p167
        $region34: #{basic_model_forward.1} parent=11 // pred_check_branch
          %267 = sbr.rel (%p265) target = $region36
        $region35: #{basic_model_forward.1} parent=11 // pred_region
          _
        $region36: #{basic_model_forward.1} parent=11 // pred_fallthru
          _
        // Predicated region
        $region37: #{basic_model_forward.1} parent=11 // pred_check
          %p268 = pneg %p188
        $region38: #{basic_model_forward.1} parent=11 // pred_check_branch
          %270 = sbr.rel (%p268) target = $region40
        $region39: #{basic_model_forward.1} parent=11 // pred_region
          _
        $region40: #{basic_model_forward.1} parent=11 // pred_fallthru
          _
        // Predicated region
        $region41: #{basic_model_forward.1} parent=11 // pred_check
          %p271 = pneg %p209
        $region42: #{basic_model_forward.1} parent=11 // pred_check_branch
          %273 = sbr.rel (%p271) target = $region44
        $region43: #{basic_model_forward.1} parent=11 // pred_region
          _
        $region44: #{basic_model_forward.1} parent=11 // pred_fallthru
          _
      $region12: #{basic_model_forward.1} parent=5 // pred_fallthru
        _
      %p274 = scmp.lt.s32.totalorder %s15, 2
      // Predicated region
      $region45: #{basic_model_forward.1} parent=5 // pred_check
        %p275 = pneg %p274
      $region46: #{basic_model_forward.1} parent=5 // pred_check_branch
        %277 = sbr.rel (%p275) target = $region48
      $region47: #{basic_model_forward.1} parent=5 // pred_region
        // Predicated region
        $region49: #{basic_model_forward.1} parent=47 // pred_check
          %p278 = pneg %p35
        $region50: #{basic_model_forward.1} parent=47 // pred_check_branch
          %280 = sbr.rel (%p278) target = $region52
        $region51: #{basic_model_forward.1} parent=47 // pred_region
          %s281 = smul.u32 2, %s15
          %s282 = ssub.s32 3, %s281
          %p283 = scmp.lt.s32.totalorder %s282, 2
          %s284 = scalar_select %p283, %s282, 2
          %s285 = smul.u32 8, %s284
          %p286 = scmp.lt.s32.totalorder %s281, 2
          %s287 = scalar_select %p286, %s281, 2
          %s288 = smul.addr %s287, 8
          %s289 = scalar_lea.vmem %s0, %s288
          %s290 = smul.u32 2, %s15
          %s291 = ssub.s32 3, %s290
          %p292 = scmp.lt.s32.totalorder %s291, 2
          %s293 = scalar_select %p292, %s291, 2
          %s294 = smul.u32 8, %s293
        $region52: #{basic_model_forward.1} parent=47 // pred_fallthru
          _
      $region48: #{basic_model_forward.1} parent=5 // pred_fallthru
        _
      %p295 = scmp.le.s32.totalorder 1, %s15
      %p296 = scmp.lt.s32.totalorder %s15, 3
      %p297 = pnand %p295, %p296
      %p298 = pneg %p297
      // Predicated region
      $region53: #{basic_model_forward.1} parent=5 // pred_check
        _
      $region54: #{basic_model_forward.1} parent=5 // pred_check_branch
        %300 = sbr.rel (%p297) target = $region56
      $region55: #{basic_model_forward.1} parent=5 // pred_region
        %s301 = ssub.s32 %s15, 1
        %s302 = smul.u32 2, %s20
        %s303 = ssub.s32 3, %s302
        %p304 = scmp.lt.s32.totalorder %s303, 2
        %s305 = scalar_select %p304, %s303, 2
        %s306 = smul.u32 8, %s305
        %p307 = scmp.lt.s32.totalorder %s302, 2
        %s308 = scalar_select %p307, %s302, 2
        %s309 = smul.addr %s308, 8
        %s310 = scalar_lea.vmem %s0, %s309
        %p311 = pneg %p41
        %p312 = pneg %p38
        %p313 = pneg %p62
        %p314 = pneg %p59
        %p315 = pneg %p83
        %p316 = pneg %p80
        %p317 = pneg %p104
        %p318 = pneg %p101
        %p319 = pneg %p125
        %p320 = pneg %p122
        %p321 = pneg %p146
        %p322 = pneg %p143
        %p323 = pneg %p167
        %p324 = pneg %p164
        %p325 = pneg %p188
        %p326 = pneg %p185
        %p327 = pneg %p209
        %p328 = pneg %p206
        %p329 = pneg %p235
        %p330 = pneg %p232
        %s331 = sand.u32 %s222, 1
        %s332 = sand.u32 %s222, 1
        %s333 = smul.addr %s332, 16
        %s334 = scalar_lea.vmem [#allocation2], %s333
        %s335 = smul.u32 2, %s20
        %s336 = ssub.s32 3, %s335
        %p337 = scmp.lt.s32.totalorder %s336, 2
        %s338 = scalar_select %p337, %s336, 2
        %s339 = smul.u32 8, %s338
        %p340 = scmp.lt.s32.totalorder %s335, 2
        %s341 = scalar_select %p340, %s335, 2
        %s342 = smul.addr %s341, 8
        %s343 = scalar_lea.vmem %s0, %s342
        %s344 = smul.u32 2, %s20
        %s345 = ssub.s32 3, %s344
        %p346 = scmp.lt.s32.totalorder %s345, 2
        %s347 = scalar_select %p346, %s345, 2
        %s348 = smul.u32 8, %s347
        %s349 = smul.u32 2, %s20
        %s350 = ssub.s32 3, %s349
        %p351 = scmp.lt.s32.totalorder %s350, 2
        %s352 = scalar_select %p351, %s350, 2
        %s353 = smul.u32 8, %s352
        %v355 = vld [vmem:[%s343] sm:$0xff]
        %v356 = vld [vmem:[%s343 + $0x8] sm:$0xff]
        %v357 = vld [vmem:[%s1] sm:$0x1]
        %359 = vset.pattern.permute.xlu0 0
        %360 = vperm.xlu0 %359, %v355
        %v361 = vpop.permute.xlu0 %360
        %364 = vset.pattern.permute.xlu0 0
        %365 = vperm.xlu0 %364, %v356
        %v366 = vpop.permute.xlu0 %365
        %v368 = vperm.slane %v357, 0
        %v369 = vmul.f32 %v361, %v368
        %v370 = vmul.f32 %v366, %v368
        %v371 = vld [vmem:[%s1 + $0x1] sm:$0x1]
        %372 = vset.pattern.permute.xlu0 1
        %373 = vperm.xlu0 %372, %v355
        %v374 = vpop.permute.xlu0 %373
        %376 = vset.pattern.permute.xlu0 1
        %377 = vperm.xlu0 %376, %v356
        %v378 = vpop.permute.xlu0 %377
        %v380 = vperm.slane %v371, 0
        %v381 = vmul.f32 %v374, %v380
        %v382 = vmul.f32 %v378, %v380
        %v383 = vadd.f32 %v369, %v381
        %v384 = vadd.f32 %v370, %v382
        %v385 = vld [vmem:[%s2] sm:$0x1]
        %v387 = vperm.slane %v385, 0
        %v389 = vadd.f32 %v383, %v387
        %v390 = vadd.f32 %v384, %v387
        %v391 = vmax.f32 %v389, 0.0
        %v392 = vmax.f32 %v390, 0.0
        %v393 = vpack.c.bf16 %v392, %v391
        %v394 = vld [vmem:[%s3] sm:$0xff]
        %v395 = vld [vmem:[%s3 + $0x10] sm:$0xff]
        %v396 = vld [vmem:[%s4] sm:$0x3]
        %v398 = vperm.slane %v396, 0
        %v399 = vperm.slane %v396, 1
        %v404 = vunpack.c.l.b16 %v394
        %v405 = vunpack.c.h.b16 %v394
        %v406 = vunpack.c.l.b16 %v395
        %v407 = vunpack.c.h.b16 %v395
        %v408 = vpack.c.b16 %v406, %v404
        %v409 = vpack.c.b16 %v407, %v405
        %vm412 = vcmask 130048
        %v414 = vsel %vm412, %v393, 0
        %416 = vmatpush.bf16.msra.mxu0 0
        %417 = vmatpush.bf16.msra.mxu0 0
        %418 = vmatpush.bf16.msra.mxu0 0
        %419 = vmatpush.bf16.msra.mxu0 0
        %420 = vmatpush.bf16.msra.mxu0 0
        %421 = vmatpush.bf16.msra.mxu0 0
        %422 = vmatpush.bf16.msra.mxu0 0
        %423 = vmatpush.bf16.msra.mxu0 %v408
        %424 = vmatmul.bf16.gmra.mxu0 %v414
        %v425 = vpop.f32.mrf.mxu0
        %v426 = vadd.f32 %v398, %v425
        %v427 = vpop.f32.mrf.mxu0
        %v428 = vadd.f32 %v398, %v427
        %429 = vdwg.mxu0
        %430 = vmatpush.bf16.msra.mxu0 0
        %431 = vmatpush.bf16.msra.mxu0 0
        %432 = vmatpush.bf16.msra.mxu0 0
        %433 = vmatpush.bf16.msra.mxu0 0
        %434 = vmatpush.bf16.msra.mxu0 0
        %435 = vmatpush.bf16.msra.mxu0 0
        %436 = vmatpush.bf16.msra.mxu0 0
        %437 = vmatpush.bf16.msra.mxu0 %v409
        %438 = vmatmul.bf16.gmra.mxu0 %v414
        %v439 = vpop.f32.mrf.mxu0
        %v440 = vadd.f32 %v399, %v439
        %v441 = vpop.f32.mrf.mxu0
        %v442 = vadd.f32 %v399, %v441
        %443 = vdwg.mxu0
        %v444 = vmax.f32 %v426, 0.0
        %v445 = vmax.f32 %v440, 0.0
        %v446 = vmax.f32 %v428, 0.0
        %v447 = vmax.f32 %v442, 0.0
        %v448 = vpack.c.bf16 %v446, %v444
        %v449 = vpack.c.bf16 %v447, %v445
        %v450 = vld [vmem:[%s5] sm:$0xf]
        %v451 = vld [vmem:[%s5 + $0x4] sm:$0xf]
        %v452 = vld [vmem:[%s5 + $0x8] sm:$0xf]
        %v453 = vld [vmem:[%s5 + $0xc] sm:$0xf]
        %v454 = vld [vmem:[%s5 + $0x10] sm:$0xf]
        %v455 = vld [vmem:[%s5 + $0x14] sm:$0xf]
        %v456 = vld [vmem:[%s5 + $0x18] sm:$0xf]
        %v457 = vld [vmem:[%s5 + $0x1c] sm:$0xf]
        %v458 = vld [vmem:[%s5 + $0x20] sm:$0xf]
        %v459 = vld [vmem:[%s5 + $0x24] sm:$0xf]
        %v460 = vld [vmem:[%s5 + $0x28] sm:$0xf]
        %v461 = vld [vmem:[%s5 + $0x2c] sm:$0xf]
        %v462 = vld [vmem:[%s5 + $0x30] sm:$0xf]
        %v463 = vld [vmem:[%s5 + $0x34] sm:$0xf]
        %v464 = vld [vmem:[%s5 + $0x38] sm:$0xf]
        %v465 = vld [vmem:[%s5 + $0x3c] sm:$0xf]
        %v466 = vld [vmem:[%s5 + $0x40] sm:$0xf]
        %v467 = vld [vmem:[%s5 + $0x44] sm:$0xf]
        %v468 = vld [vmem:[%s5 + $0x48] sm:$0xf]
        %v469 = vld [vmem:[%s5 + $0x4c] sm:$0xf]
        %v470 = vld [vmem:[%s5 + $0x50] sm:$0xf]
        %v471 = vld [vmem:[%s5 + $0x54] sm:$0xf]
        %v472 = vld [vmem:[%s5 + $0x58] sm:$0xf]
        %v473 = vld [vmem:[%s5 + $0x5c] sm:$0xf]
        %v474 = vld [vmem:[%s5 + $0x60] sm:$0xf]
        %v475 = vld [vmem:[%s5 + $0x64] sm:$0xf]
        %v476 = vld [vmem:[%s5 + $0x68] sm:$0xf]
        %v477 = vld [vmem:[%s5 + $0x6c] sm:$0xf]
        %v478 = vld [vmem:[%s5 + $0x70] sm:$0xf]
        %v479 = vld [vmem:[%s5 + $0x74] sm:$0xf]
        %v480 = vld [vmem:[%s5 + $0x78] sm:$0xf]
        %v481 = vld [vmem:[%s5 + $0x7c] sm:$0xf]
        %v482 = vld [vmem:[%s3 + $0x8] sm:$0xff]
        %v483 = vld [vmem:[%s3 + $0x18] sm:$0xff]
        %v484 = vld [vmem:[%s4 + $0x2] sm:$0x3]
        %v486 = vperm.slane %v484, 0
        %v487 = vperm.slane %v484, 1
        %v492 = vunpack.c.l.b16 %v482
        %v493 = vunpack.c.h.b16 %v482
        %v494 = vunpack.c.l.b16 %v483
        %v495 = vunpack.c.h.b16 %v483
        %v496 = vpack.c.b16 %v494, %v492
        %v497 = vpack.c.b16 %v495, %v493
        %500 = vmatpush.bf16.msra.mxu0 0
        %501 = vmatpush.bf16.msra.mxu0 0
        %502 = vmatpush.bf16.msra.mxu0 0
        %503 = vmatpush.bf16.msra.mxu0 0
        %504 = vmatpush.bf16.msra.mxu0 0
        %505 = vmatpush.bf16.msra.mxu0 0
        %506 = vmatpush.bf16.msra.mxu0 0
        %507 = vmatpush.bf16.msra.mxu0 %v496
        %508 = vmatmul.bf16.gmra.mxu0 %v414
        %v509 = vpop.f32.mrf.mxu0
        %v510 = vadd.f32 %v486, %v509
        %v511 = vpop.f32.mrf.mxu0
        %v512 = vadd.f32 %v486, %v511
        %513 = vdwg.mxu0
        %514 = vmatpush.bf16.msra.mxu0 0
        %515 = vmatpush.bf16.msra.mxu0 0
        %516 = vmatpush.bf16.msra.mxu0 0
        %517 = vmatpush.bf16.msra.mxu0 0
        %518 = vmatpush.bf16.msra.mxu0 0
        %519 = vmatpush.bf16.msra.mxu0 0
        %520 = vmatpush.bf16.msra.mxu0 0
        %521 = vmatpush.bf16.msra.mxu0 %v497
        %522 = vmatmul.bf16.gmra.mxu0 %v414
        %v523 = vpop.f32.mrf.mxu0
        %v524 = vadd.f32 %v487, %v523
        %v525 = vpop.f32.mrf.mxu0
        %v526 = vadd.f32 %v487, %v525
        %527 = vdwg.mxu0
        %v528 = vmax.f32 %v510, 0.0
        %v529 = vmax.f32 %v524, 0.0
        %v530 = vmax.f32 %v512, 0.0
        %v531 = vmax.f32 %v526, 0.0
        %v532 = vpack.c.bf16 %v530, %v528
        %v533 = vpack.c.bf16 %v531, %v529
        %v534 = vld [vmem:[%s5 + $0x80] sm:$0xf]
        %v535 = vld [vmem:[%s5 + $0x84] sm:$0xf]
        %v536 = vld [vmem:[%s5 + $0x88] sm:$0xf]
        %v537 = vld [vmem:[%s5 + $0x8c] sm:$0xf]
        %v538 = vld [vmem:[%s5 + $0x90] sm:$0xf]
        %v539 = vld [vmem:[%s5 + $0x94] sm:$0xf]
        %v540 = vld [vmem:[%s5 + $0x98] sm:$0xf]
        %v541 = vld [vmem:[%s5 + $0x9c] sm:$0xf]
        %v542 = vld [vmem:[%s5 + $0xa0] sm:$0xf]
        %v543 = vld [vmem:[%s5 + $0xa4] sm:$0xf]
        %v544 = vld [vmem:[%s5 + $0xa8] sm:$0xf]
        %v545 = vld [vmem:[%s5 + $0xac] sm:$0xf]
        %v546 = vld [vmem:[%s5 + $0xb0] sm:$0xf]
        %v547 = vld [vmem:[%s5 + $0xb4] sm:$0xf]
        %v548 = vld [vmem:[%s5 + $0xb8] sm:$0xf]
        %v549 = vld [vmem:[%s5 + $0xbc] sm:$0xf]
        %v550 = vld [vmem:[%s5 + $0xc0] sm:$0xf]
        %v551 = vld [vmem:[%s5 + $0xc4] sm:$0xf]
        %v552 = vld [vmem:[%s5 + $0xc8] sm:$0xf]
        %v553 = vld [vmem:[%s5 + $0xcc] sm:$0xf]
        %v554 = vld [vmem:[%s5 + $0xd0] sm:$0xf]
        %v555 = vld [vmem:[%s5 + $0xd4] sm:$0xf]
        %v556 = vld [vmem:[%s5 + $0xd8] sm:$0xf]
        %v557 = vld [vmem:[%s5 + $0xdc] sm:$0xf]
        %v558 = vld [vmem:[%s5 + $0xe0] sm:$0xf]
        %v559 = vld [vmem:[%s5 + $0xe4] sm:$0xf]
        %v560 = vld [vmem:[%s5 + $0xe8] sm:$0xf]
        %v561 = vld [vmem:[%s5 + $0xec] sm:$0xf]
        %v562 = vld [vmem:[%s5 + $0xf0] sm:$0xf]
        %v563 = vld [vmem:[%s5 + $0xf4] sm:$0xf]
        %v564 = vld [vmem:[%s5 + $0xf8] sm:$0xf]
        %v565 = vld [vmem:[%s5 + $0xfc] sm:$0xf]
        %v598 = vunpack.c.l.b16 %v534
        %v599 = vunpack.c.l.b16 %v535
        %v600 = vunpack.c.l.b16 %v536
        %v601 = vunpack.c.l.b16 %v537
        %v602 = vunpack.c.l.b16 %v538
        %v603 = vunpack.c.l.b16 %v539
        %v604 = vunpack.c.l.b16 %v540
        %v605 = vunpack.c.l.b16 %v541
        %v606 = vunpack.c.l.b16 %v542
        %v607 = vunpack.c.l.b16 %v543
        %v608 = vunpack.c.l.b16 %v544
        %v609 = vunpack.c.l.b16 %v545
        %v610 = vunpack.c.l.b16 %v546
        %v611 = vunpack.c.l.b16 %v547
        %v612 = vunpack.c.l.b16 %v548
        %v613 = vunpack.c.l.b16 %v549
        %v614 = vunpack.c.l.b16 %v550
        %v615 = vunpack.c.l.b16 %v551
        %v616 = vunpack.c.l.b16 %v552
        %v617 = vunpack.c.l.b16 %v553
        %v618 = vunpack.c.l.b16 %v554
        %v619 = vunpack.c.l.b16 %v555
        %v620 = vunpack.c.l.b16 %v556
        %v621 = vunpack.c.l.b16 %v557
        %v622 = vunpack.c.l.b16 %v558
        %v623 = vunpack.c.l.b16 %v559
        %v624 = vunpack.c.l.b16 %v560
        %v625 = vunpack.c.l.b16 %v561
        %v626 = vunpack.c.l.b16 %v562
        %v627 = vunpack.c.l.b16 %v563
        %v628 = vunpack.c.l.b16 %v564
        %v629 = vunpack.c.l.b16 %v565
        %v630 = vpack.c.b16 %v599, %v598
        %v631 = vpack.c.b16 %v601, %v600
        %v632 = vpack.c.b16 %v603, %v602
        %v633 = vpack.c.b16 %v605, %v604
        %v634 = vpack.c.b16 %v607, %v606
        %v635 = vpack.c.b16 %v609, %v608
        %v636 = vpack.c.b16 %v611, %v610
        %v637 = vpack.c.b16 %v613, %v612
        %v638 = vpack.c.b16 %v615, %v614
        %v639 = vpack.c.b16 %v617, %v616
        %v640 = vpack.c.b16 %v619, %v618
        %v641 = vpack.c.b16 %v621, %v620
        %v642 = vpack.c.b16 %v623, %v622
        %v643 = vpack.c.b16 %v625, %v624
        %v644 = vpack.c.b16 %v627, %v626
        %v645 = vpack.c.b16 %v629, %v628
        %662 = vmatpush.bf16.msra.mxu0 %v637
        %663 = vmatpush.bf16.msra.mxu0 %v636
        %664 = vmatpush.bf16.msra.mxu0 %v635
        %665 = vmatpush.bf16.msra.mxu0 %v634
        %666 = vmatpush.bf16.msra.mxu0 %v633
        %667 = vmatpush.bf16.msra.mxu0 %v632
        %668 = vmatpush.bf16.msra.mxu0 %v631
        %669 = vmatpush.bf16.msra.mxu0 %v630
        %670 = vmatmul.bf16.gmra.mxu0 %v532
        %v671 = vpop.f32.mrf.mxu0
        %v672 = vadd.f32 0.0, %v671
        %v673 = vpop.f32.mrf.mxu0
        %v674 = vadd.f32 0.0, %v673
        %675 = vdwg.mxu0
        %676 = vmatpush.bf16.msra.mxu0 %v645
        %677 = vmatpush.bf16.msra.mxu0 %v644
        %678 = vmatpush.bf16.msra.mxu0 %v643
        %679 = vmatpush.bf16.msra.mxu0 %v642
        %680 = vmatpush.bf16.msra.mxu0 %v641
        %681 = vmatpush.bf16.msra.mxu0 %v640
        %682 = vmatpush.bf16.msra.mxu0 %v639
        %683 = vmatpush.bf16.msra.mxu0 %v638
        %684 = vmatmul.bf16.gmra.mxu0 %v533
        %v685 = vpop.f32.mrf.mxu0
        %v686 = vadd.f32 %v672, %v685
        %v687 = vpop.f32.mrf.mxu0
        %v688 = vadd.f32 %v674, %v687
        %689 = vdwg.mxu0
        %v722 = vunpack.c.l.b16 %v450
        %v723 = vunpack.c.l.b16 %v451
        %v724 = vunpack.c.l.b16 %v452
        %v725 = vunpack.c.l.b16 %v453
        %v726 = vunpack.c.l.b16 %v454
        %v727 = vunpack.c.l.b16 %v455
        %v728 = vunpack.c.l.b16 %v456
        %v729 = vunpack.c.l.b16 %v457
        %v730 = vunpack.c.l.b16 %v458
        %v731 = vunpack.c.l.b16 %v459
        %v732 = vunpack.c.l.b16 %v460
        %v733 = vunpack.c.l.b16 %v461
        %v734 = vunpack.c.l.b16 %v462
        %v735 = vunpack.c.l.b16 %v463
        %v736 = vunpack.c.l.b16 %v464
        %v737 = vunpack.c.l.b16 %v465
        %v738 = vunpack.c.l.b16 %v466
        %v739 = vunpack.c.l.b16 %v467
        %v740 = vunpack.c.l.b16 %v468
        %v741 = vunpack.c.l.b16 %v469
        %v742 = vunpack.c.l.b16 %v470
        %v743 = vunpack.c.l.b16 %v471
        %v744 = vunpack.c.l.b16 %v472
        %v745 = vunpack.c.l.b16 %v473
        %v746 = vunpack.c.l.b16 %v474
        %v747 = vunpack.c.l.b16 %v475
        %v748 = vunpack.c.l.b16 %v476
        %v749 = vunpack.c.l.b16 %v477
        %v750 = vunpack.c.l.b16 %v478
        %v751 = vunpack.c.l.b16 %v479
        %v752 = vunpack.c.l.b16 %v480
        %v753 = vunpack.c.l.b16 %v481
        %v754 = vpack.c.b16 %v723, %v722
        %v755 = vpack.c.b16 %v725, %v724
        %v756 = vpack.c.b16 %v727, %v726
        %v757 = vpack.c.b16 %v729, %v728
        %v758 = vpack.c.b16 %v731, %v730
        %v759 = vpack.c.b16 %v733, %v732
        %v760 = vpack.c.b16 %v735, %v734
        %v761 = vpack.c.b16 %v737, %v736
        %v762 = vpack.c.b16 %v739, %v738
        %v763 = vpack.c.b16 %v741, %v740
        %v764 = vpack.c.b16 %v743, %v742
        %v765 = vpack.c.b16 %v745, %v744
        %v766 = vpack.c.b16 %v747, %v746
        %v767 = vpack.c.b16 %v749, %v748
        %v768 = vpack.c.b16 %v751, %v750
        %v769 = vpack.c.b16 %v753, %v752
        %786 = vmatpush.bf16.msra.mxu0 %v761
        %787 = vmatpush.bf16.msra.mxu0 %v760
        %788 = vmatpush.bf16.msra.mxu0 %v759
        %789 = vmatpush.bf16.msra.mxu0 %v758
        %790 = vmatpush.bf16.msra.mxu0 %v757
        %791 = vmatpush.bf16.msra.mxu0 %v756
        %792 = vmatpush.bf16.msra.mxu0 %v755
        %793 = vmatpush.bf16.msra.mxu0 %v754
        %794 = vmatmul.bf16.gmra.mxu0 %v448
        %v795 = vpop.f32.mrf.mxu0
        %v796 = vadd.f32 %v686, %v795
        %v797 = vpop.f32.mrf.mxu0
        %v798 = vadd.f32 %v688, %v797
        %799 = vdwg.mxu0
        %800 = vmatpush.bf16.msra.mxu0 %v769
        %801 = vmatpush.bf16.msra.mxu0 %v768
        %802 = vmatpush.bf16.msra.mxu0 %v767
        %803 = vmatpush.bf16.msra.mxu0 %v766
        %804 = vmatpush.bf16.msra.mxu0 %v765
        %805 = vmatpush.bf16.msra.mxu0 %v764
        %806 = vmatpush.bf16.msra.mxu0 %v763
        %807 = vmatpush.bf16.msra.mxu0 %v762
        %808 = vmatmul.bf16.gmra.mxu0 %v449
        %v809 = vpop.f32.mrf.mxu0
        %v810 = vadd.f32 %v796, %v809
        %v811 = vpop.f32.mrf.mxu0
        %v812 = vadd.f32 %v798, %v811
        %813 = vdwg.mxu0
        %v814 = vld [vmem:[%s6] sm:$0x1]
        %v816 = vperm.slane %v814, 0
        %v818 = vadd.f32 %v810, %v816
        %v819 = vadd.f32 %v812, %v816
        %v820 = vmax.f32 %v818, 0.0
        %v821 = vmax.f32 %v819, 0.0
        %v822 = vld [vmem:[%s7] sm:$0x1]
        %v823 = vperm.slane %v822, 0
        %v824 = vmul.f32 %v820, %v823
        %v825 = vmul.f32 %v821, %v823
        %v826 = vsel %vm412, %v824, 0.0
        %827 = vadd.xlane.f32.xlu0 %v826
        %v828 = vpop.xlane.xlu0 %827
        %v829 = vsel %vm412, %v825, 0.0
        %830 = vadd.xlane.f32.xlu0 %v829
        %v831 = vpop.xlane.xlu0 %830
        %v832 = vld [vmem:[%s8] sm:$0x1]
        %v834 = vperm.slane %v832, 0
        %v836 = vadd.f32 %v828, %v834
        %v837 = vadd.f32 %v831, %v834
        %v838 = vld [vmem:[%s7 + $0x1] sm:$0x1]
        %v839 = vperm.slane %v838, 0
        %v840 = vmul.f32 %v820, %v839
        %v841 = vmul.f32 %v821, %v839
        %v842 = vsel %vm412, %v840, 0.0
        %843 = vadd.xlane.f32.xlu0 %v842
        %v844 = vpop.xlane.xlu0 %843
        %v845 = vsel %vm412, %v841, 0.0
        %846 = vadd.xlane.f32.xlu0 %v845
        %v847 = vpop.xlane.xlu0 %846
        %v848 = vadd.f32 %v844, %v834
        %v849 = vadd.f32 %v847, %v834
        %v850 = vmax.f32 %v836, 0.0
        %v851 = vmax.f32 %v837, 0.0
        %vm852 = vcmask 7168
        %853 = vst.msk [vmem:[%s334] sm:$0xff] %vm852, %v850
        %854 = vst.msk [vmem:[%s334 + $0x8] sm:$0xff] %vm852, %v851
        %v855 = vmax.f32 %v848, 0.0
        %v856 = vmax.f32 %v849, 0.0
        %vm857 = vcmask 15368
        %858 = vst.msk [vmem:[%s334] sm:$0xff] %vm857, %v855
        %859 = vst.msk [vmem:[%s334 + $0x8] sm:$0xff] %vm857, %v856
        %s860 = sand.u32 %s222, 1
        %s861 = sand.u32 %s222, 1
        %s862 = smul.addr %s861, 16
        %s863 = scalar_lea.vmem [#allocation2], %s862
        // Predicated region
        $region57: #{basic_model_forward.1} parent=55 // pred_check
          %p864 = pneg %p232
        $region58: #{basic_model_forward.1} parent=55 // pred_check_branch
          %866 = sbr.rel (%p864) target = $region60
        $region59: #{basic_model_forward.1} parent=55 // pred_region
          %s867 = smul.u32 2, %s20
          %s868 = ssub.s32 3, %s867
          %p869 = scmp.lt.s32.totalorder %s868, 2
          %s870 = scalar_select %p869, %s868, 2
          %s871 = smul.u32 8, %s870
          %p872 = scmp.ne.s32.totalorder 0, %s871
          %s873 = smul.addr %s867, 8
          %s874 = scalar_lea.vmem %s9, %s873
          // Predicated region
          $region61: #{basic_model_forward.1} parent=59 // pred_check
            %p875 = pneg %p872
          $region62: #{basic_model_forward.1} parent=59 // pred_check_branch
            %877 = sbr.rel (%p875) target = $region64
          $region63: #{basic_model_forward.1} parent=59 // pred_region
            // Predicated region
            $region65: #{basic_model_forward.1} parent=63 // pred_check
              _
            $region66: #{basic_model_forward.1} parent=63 // pred_check_branch
              %879 = sbr.rel (0) target = $region68
            $region67: #{basic_model_forward.1} parent=63 // pred_region
              // Predicated region
              $region87: #{basic_model_forward.1} parent=67 // pred_check
                _
              $region88: #{basic_model_forward.1} parent=67 // pred_check_branch
                %931 = sbr.rel (0) target = $region90
              $region89: #{basic_model_forward.1} parent=67 // pred_region
                %s932 = sshrl.u32 %s870, 1
                // While loop
                $region91: #{basic_model_forward.1} parent=89 // loop_pre_header
                  _
                $region92: #{basic_model_forward.1} parent=89 // loop_header
                  %s934 = sphi 0, %s936
                  %p935 = scmp.ge.s32.totalorder %s934, %s932
                  %s939 = sphi 0, %s948
                  %s940 = sphi %s863, %s951
                  %s941 = sphi %s874, %s952
                $region93: #{basic_model_forward.1} parent=89 // loop_header_branch
                  %938 = sbr.rel (%p935) target = $region97
                $region94: #{basic_model_forward.1} parent=89 // loop_body
                  %v942 = vld [vmem:[%s940] sm:$0xff]
                  %943 = vst [vmem:[%s941] sm:$0xff] %v942
                  %v944 = vld [vmem:[%s940 + $0x8] sm:$0xff]
                  %945 = vst [vmem:[%s941 + $0x8] sm:$0xff] %v944
                  %s946 = sadd.s32 1, %s939
                  %p947 = scmp.ge.s32.totalorder %s946, %s932
                  %s948 = scalar_select %p947, 0, %s946
                  %s949 = smul.u32 %s948, 16
                  %s950 = smul.u32 %s948, 16
                  %s951 = scalar_lea.vmem %s863, %s949 [#allocation2]
                  %s952 = scalar_lea.vmem %s874, %s950
                $region95: #{basic_model_forward.1} parent=89 // loop_footer
                  %s936 = sadd.s32 %s934, 1
                $region96: #{basic_model_forward.1} parent=89 // loop_footer_branch
                  %933 = sbr.rel target = $region92
                $region97: #{basic_model_forward.1} parent=89 // loop_exit
                  _
                %s953 = sshrl.u32 %s870, 1
                %s954 = sand.u32 %s870, 1
                %s955 = smul.u32 %s953, 2
                %s956 = smul.u32 8, %s955
                %s957 = scalar_lea.vmem %s863, %s956 [#allocation2]
                %s958 = smul.u32 8, %s955
                %s959 = scalar_lea.vmem %s874, %s958
                // While loop
                $region98: #{basic_model_forward.1} parent=89 // loop_pre_header
                  _
                $region99: #{basic_model_forward.1} parent=89 // loop_header
                  %s961 = sphi 0, %s963
                  %p962 = scmp.ge.s32.totalorder %s961, %s954
                  %s966 = sphi 0, %s973
                  %s967 = sphi %s957, %s976
                  %s968 = sphi %s959, %s977
                $region100: #{basic_model_forward.1} parent=89 // loop_header_branch
                  %965 = sbr.rel (%p962) target = $region104
                $region101: #{basic_model_forward.1} parent=89 // loop_body
                  %v969 = vld [vmem:[%s967] sm:$0xff]
                  %970 = vst [vmem:[%s968] sm:$0xff] %v969
                  %s971 = sadd.s32 1, %s966
                  %p972 = scmp.ge.s32.totalorder %s971, %s954
                  %s973 = scalar_select %p972, 0, %s971
                  %s974 = smul.u32 %s973, 8
                  %s975 = smul.u32 %s973, 8
                  %s976 = scalar_lea.vmem %s957, %s974 [#allocation2]
                  %s977 = scalar_lea.vmem %s959, %s975
                $region102: #{basic_model_forward.1} parent=89 // loop_footer
                  %s963 = sadd.s32 %s961, 1
                $region103: #{basic_model_forward.1} parent=89 // loop_footer_branch
                  %960 = sbr.rel target = $region99
                $region104: #{basic_model_forward.1} parent=89 // loop_exit
                  _
              $region90: #{basic_model_forward.1} parent=67 // pred_fallthru
                _
              // Predicated region
              $region105: #{basic_model_forward.1} parent=67 // pred_check
                _
              $region106: #{basic_model_forward.1} parent=67 // pred_check_branch
                %979 = sbr.rel target = $region108
              $region107: #{basic_model_forward.1} parent=67 // pred_region
                _
              $region108: #{basic_model_forward.1} parent=67 // pred_fallthru
                _
            $region68: #{basic_model_forward.1} parent=63 // pred_fallthru
              _
            // Predicated region
            $region69: #{basic_model_forward.1} parent=63 // pred_check
              _
            $region70: #{basic_model_forward.1} parent=63 // pred_check_branch
              %881 = sbr.rel target = $region72
            $region71: #{basic_model_forward.1} parent=63 // pred_region
              %s883 = ssub.s32 256, 1
              %s884 = sshrl.u32 %s870, 1
              // While loop
              $region73: #{basic_model_forward.1} parent=71 // loop_pre_header
                _
              $region74: #{basic_model_forward.1} parent=71 // loop_header
                %s886 = sphi 0, %s888
                %p887 = scmp.ge.s32.totalorder %s886, %s884
                %s891 = sphi 0, %s900
                %s892 = sphi %s863, %s903
                %s893 = sphi %s874, %s904
              $region75: #{basic_model_forward.1} parent=71 // loop_header_branch
                %890 = sbr.rel (%p887) target = $region79
              $region76: #{basic_model_forward.1} parent=71 // loop_body
                %v894 = vld [vmem:[%s892] sm:%s883]
                %895 = vst [vmem:[%s893] sm:%s883] %v894
                %v896 = vld [vmem:[%s892 + $0x8] sm:%s883]
                %897 = vst [vmem:[%s893 + $0x8] sm:%s883] %v896
                %s898 = sadd.s32 1, %s891
                %p899 = scmp.ge.s32.totalorder %s898, %s884
                %s900 = scalar_select %p899, 0, %s898
                %s901 = smul.u32 %s900, 16
                %s902 = smul.u32 %s900, 16
                %s903 = scalar_lea.vmem %s863, %s901 [#allocation2]
                %s904 = scalar_lea.vmem %s874, %s902
              $region77: #{basic_model_forward.1} parent=71 // loop_footer
                %s888 = sadd.s32 %s886, 1
              $region78: #{basic_model_forward.1} parent=71 // loop_footer_branch
                %885 = sbr.rel target = $region74
              $region79: #{basic_model_forward.1} parent=71 // loop_exit
                _
              %s905 = sshrl.u32 %s870, 1
              %s906 = sand.u32 %s870, 1
              %s907 = smul.u32 %s905, 2
              %s908 = smul.u32 8, %s907
              %s909 = scalar_lea.vmem %s863, %s908 [#allocation2]
              %s910 = smul.u32 8, %s907
              %s911 = scalar_lea.vmem %s874, %s910
              // While loop
              $region80: #{basic_model_forward.1} parent=71 // loop_pre_header
                _
              $region81: #{basic_model_forward.1} parent=71 // loop_header
                %s913 = sphi 0, %s915
                %p914 = scmp.ge.s32.totalorder %s913, %s906
                %s918 = sphi 0, %s925
                %s919 = sphi %s909, %s928
                %s920 = sphi %s911, %s929
              $region82: #{basic_model_forward.1} parent=71 // loop_header_branch
                %917 = sbr.rel (%p914) target = $region86
              $region83: #{basic_model_forward.1} parent=71 // loop_body
                %v921 = vld [vmem:[%s919] sm:%s883]
                %922 = vst [vmem:[%s920] sm:%s883] %v921
                %s923 = sadd.s32 1, %s918
                %p924 = scmp.ge.s32.totalorder %s923, %s906
                %s925 = scalar_select %p924, 0, %s923
                %s926 = smul.u32 %s925, 8
                %s927 = smul.u32 %s925, 8
                %s928 = scalar_lea.vmem %s909, %s926 [#allocation2]
                %s929 = scalar_lea.vmem %s911, %s927
              $region84: #{basic_model_forward.1} parent=71 // loop_footer
                %s915 = sadd.s32 %s913, 1
              $region85: #{basic_model_forward.1} parent=71 // loop_footer_branch
                %912 = sbr.rel target = $region81
              $region86: #{basic_model_forward.1} parent=71 // loop_exit
                _
            $region72: #{basic_model_forward.1} parent=63 // pred_fallthru
              _
          $region64: #{basic_model_forward.1} parent=59 // pred_fallthru
            _
          %980 = vnop
        $region60: #{basic_model_forward.1} parent=55 // pred_fallthru
          _
      $region56: #{basic_model_forward.1} parent=5 // pred_fallthru
        _
      %p981 = scmp.le.s32.totalorder 2, %s15
      // Predicated region
      $region109: #{basic_model_forward.1} parent=5 // pred_check
        %p982 = pneg %p981
      $region110: #{basic_model_forward.1} parent=5 // pred_check_branch
        %984 = sbr.rel (%p982) target = $region112
      $region111: #{basic_model_forward.1} parent=5 // pred_region
        %s985 = ssub.s32 %s15, 2
        // Predicated region
        $region113: #{basic_model_forward.1} parent=111 // pred_check
          %p986 = pneg %p238
        $region114: #{basic_model_forward.1} parent=111 // pred_check_branch
          %988 = sbr.rel (%p986) target = $region116
        $region115: #{basic_model_forward.1} parent=111 // pred_region
          %s989 = sand.u32 %s223, 1
          %s990 = sand.u32 %s223, 1
          %s991 = smul.addr %s990, 16
          %s992 = scalar_lea.vmem [#allocation2], %s991
        $region116: #{basic_model_forward.1} parent=111 // pred_fallthru
          _
      $region112: #{basic_model_forward.1} parent=5 // pred_fallthru
        _
    $region6: #{basic_model_forward.1} parent=1 // loop_footer
      %s19 = sadd.s32 1, %s15
    $region7: #{basic_model_forward.1} parent=1 // loop_footer_branch
      %14 = sbr.rel target = $region3
    $region8: #{basic_model_forward.1} parent=1 // loop_exit
      _

</llo_original>
